<compile_context>
chip_gen: v5e
topology: v5e:2x2
jax: 0.10.0
libtpu: 0.0.40
codegen_flags: <defaults>
</compile_context>

<pallas_src>
import jax
import jax.numpy as jnp
from jax.experimental import pallas as pl
from jax.experimental.pallas import tpu as pltpu

LANE = 128      # last-dim (lane) tile
SUBLANE = 8     # second-to-last (sublane) tile


def _round_up(x, m):
    return ((x + m - 1) // m) * m


def _tabular_kernel(x_ref, wt_ref, b_ref, o_ref):
    # x_ref : (tm, n_obs_pad)        -- batch tile
    # wt_ref: (n_obs_pad, n_act_pad) -- weight, resident across all batch tiles
    # b_ref : (8, n_act_pad)         -- bias in row 0, tile-aligned
    # o_ref : (tm, n_act_pad)
    acc = jnp.dot(x_ref[...], wt_ref[...], preferred_element_type=jnp.float32)
    o_ref[...] = (acc + b_ref[0:1, :]).astype(o_ref.dtype)


def prepare_tabular_params(weight, bias):
    """One-time parameter prep (NOT per-call).

    weight: (n_act, n_obs) float32  -- PyTorch nn.Linear layout
    bias:   (n_act,)       float32
    Returns:
      wt_pad: (n_obs_pad, n_act_pad) -- transposed + zero-padded, lane-dense
      b_pad:  (8, n_act_pad)         -- bias in row 0, rest zero
    """
    n_act, n_obs = weight.shape
    n_obs_pad = _round_up(n_obs, LANE)
    n_act_pad = _round_up(n_act, LANE)
    wt_pad = jnp.zeros((n_obs_pad, n_act_pad), weight.dtype)
    wt_pad = wt_pad.at[:n_obs, :n_act].set(weight.T)
    b_pad = jnp.zeros((SUBLANE, n_act_pad), bias.dtype)
    b_pad = b_pad.at[0, :n_act].set(bias)
    return wt_pad, b_pad


def tabular_forward(x, wt_pad, b_pad, n_act, *, tm=512):
    """x: (B, n_obs) f32; wt_pad/b_pad from prepare_tabular_params.

    Returns (B, n_act) f32, identical to nn.Linear(n_obs, n_act)(x).
    """
    B, n_obs = x.shape
    n_obs_pad, n_act_pad = wt_pad.shape

    # Batch tile: multiple of 8 sublanes, capped by (rounded-up) batch.
    tm = min(tm, _round_up(B, SUBLANE))
    tm = _round_up(tm, SUBLANE)
    B_pad = _round_up(B, tm)

    # Zero-pad x to lane/sublane-aligned shape (padded K columns multiply
    # zero weight rows, so they contribute nothing).
    x_pad = jnp.zeros((B_pad, n_obs_pad), x.dtype).at[:B, :n_obs].set(x)

    grid = (B_pad // tm,)
    out_pad = pl.pallas_call(
        _tabular_kernel,
        out_shape=jax.ShapeDtypeStruct((B_pad, n_act_pad), x.dtype),
        grid_spec=pltpu.PrefetchScalarGridSpec(
            num_scalar_prefetch=0,
            grid=grid,
            in_specs=[
                pl.BlockSpec((tm, n_obs_pad), lambda i: (i, 0)),        # x tile
                pl.BlockSpec((n_obs_pad, n_act_pad), lambda i: (0, 0)),  # W resident
                pl.BlockSpec((SUBLANE, n_act_pad), lambda i: (0, 0)),    # bias resident
            ],
            out_specs=pl.BlockSpec((tm, n_act_pad), lambda i: (i, 0)),
        ),
        compiler_params=pltpu.CompilerParams(
            dimension_semantics=("parallel",),  # batch tiles are independent
        ),
    )(x_pad, wt_pad, b_pad)

    # Strip padding (logical output width / batch).
    return out_pad[:B, :n_act]


def init_tabular_params(key, n_observations, n_actions):
    """Deterministic init mirroring nn.Linear default: U(-1/sqrt(fan_in), 1/sqrt(fan_in))."""
    k_w, k_b = jax.random.split(key)
    bound = 1.0 / jnp.sqrt(jnp.float32(n_observations))
    weight = jax.random.uniform(
        k_w, (n_actions, n_observations), jnp.float32, minval=-bound, maxval=bound
    )
    bias = jax.random.uniform(
        k_b, (n_actions,), jnp.float32, minval=-bound, maxval=bound
    )
    return weight, bias


if __name__ == "__main__":
    key = jax.random.PRNGKey(0)
    k_x, k_p, k_x2 = jax.random.split(key, 3)

    batch = 2
    n_observations = 32   # flattened state vector size
    n_actions = 8

    x = jax.random.normal(k_x, (batch, n_observations), jnp.float32)
    weight, bias = init_tabular_params(k_p, n_observations, n_actions)

    # One-time parameter prep (no per-call transpose).
    wt_pad, b_pad = prepare_tabular_params(weight, bias)

    out = tabular_forward(x, wt_pad, b_pad, n_actions)
    out = jax.block_until_ready(out)

    ref = x @ weight.T + bias
    assert out.shape == (batch, n_actions)
    assert jnp.allclose(out, ref, atol=1e-5, rtol=1e-5)

    # Also exercise the batch-tiled path (multiple grid steps, non-multiple batch).
    big_batch = 1030
    xb = jax.random.normal(k_x2, (big_batch, n_observations), jnp.float32)
    outb = jax.block_until_ready(tabular_forward(xb, wt_pad, b_pad, n_actions, tm=512))
    refb = xb @ weight.T + bias
    assert outb.shape == (big_batch, n_actions)
    assert jnp.allclose(outb, refb, atol=1e-4, rtol=1e-4)

    print("KERNEL_OK")
</pallas_src>

<mosaic_0001>
module attributes {stable_mosaic.version = 11 : i64} {
  func.func @_tabular_kernel(%arg0: i32, %arg1: memref<8x128xf32, #tpu.memory_space<vmem>>, %arg2: memref<128x128xf32, #tpu.memory_space<vmem>>, %arg3: memref<8x128xf32, #tpu.memory_space<vmem>>, %arg4: memref<8x128xf32, #tpu.memory_space<vmem>>) attributes {dimension_semantics = [#tpu.dimension_semantics<parallel>], iteration_bounds = array<i64: 1>, scalar_prefetch = 0 : i64, scratch_operands = 0 : i64, tpu.core_type = #tpu.core_type<tc>, window_params = [{transform_indices = @transform_0, window_bounds = array<i64: 8, 128>}, {pipeline_mode = #tpu.pipeline_mode<synchronous>, transform_indices = @transform_1, window_bounds = array<i64: 128, 128>}, {pipeline_mode = #tpu.pipeline_mode<synchronous>, transform_indices = @transform_2, window_bounds = array<i64: 8, 128>}, {transform_indices = @transform_3, window_bounds = array<i64: 8, 128>}]} {
    %c0 = arith.constant 0 : index
    %c0_0 = arith.constant 0 : index
    %0 = vector.load %arg1[%c0, %c0_0] : memref<8x128xf32, #tpu.memory_space<vmem>>, vector<8x128xf32>
    %c0_1 = arith.constant 0 : index
    %c0_2 = arith.constant 0 : index
    %1 = vector.load %arg2[%c0_1, %c0_2] : memref<128x128xf32, #tpu.memory_space<vmem>>, vector<128x128xf32>
    %cst = arith.constant dense<0.000000e+00> : vector<8x128xf32>
    %2 = tpu.matmul %0, %1, %cst {dimension_numbers = #tpu.dot_dimension_numbers<[1], [0], [0], [1], [0, 0, 1, 1], [], []>} : vector<8x128xf32>, vector<128x128xf32>, vector<8x128xf32> -> vector<8x128xf32>
    %c0_3 = arith.constant 0 : index
    %c0_4 = arith.constant 0 : index
    %3 = vector.load %arg3[%c0_3, %c0_4] : memref<8x128xf32, #tpu.memory_space<vmem>>, vector<1x128xf32>
    %4 = vector.broadcast %3 : vector<1x128xf32> to vector<8x128xf32>
    %5 = arith.addf %2, %4 : vector<8x128xf32>
    %c0_5 = arith.constant 0 : index
    %c0_6 = arith.constant 0 : index
    %6 = vector.load %arg4[%c0_5, %c0_6] : memref<8x128xf32, #tpu.memory_space<vmem>>, vector<8x128xf32>
    tpu.vector_store %arg4[%c0_5, %c0_6], %5 {strides = array<i32>} : memref<8x128xf32, #tpu.memory_space<vmem>>, vector<8x128xf32>,
    return
  }
  func.func @transform_0(%arg0: i32) -> (i32, i32) {
    %c0_i32 = arith.constant 0 : i32
    %c0_i32_0 = arith.constant 0 : i32
    return %arg0, %c0_i32 : i32, i32
  }
  func.func @transform_1(%arg0: i32) -> (i32, i32) {
    %c0_i32 = arith.constant 0 : i32
    %c0_i32_0 = arith.constant 0 : i32
    %c0_i32_1 = arith.constant 0 : i32
    return %c0_i32, %c0_i32_0 : i32, i32
  }
  func.func @transform_2(%arg0: i32) -> (i32, i32) {
    %c0_i32 = arith.constant 0 : i32
    %c0_i32_0 = arith.constant 0 : i32
    %c0_i32_1 = arith.constant 0 : i32
    return %c0_i32, %c0_i32_0 : i32, i32
  }
  func.func @transform_3(%arg0: i32) -> (i32, i32) {
    %c0_i32 = arith.constant 0 : i32
    %c0_i32_0 = arith.constant 0 : i32
    return %arg0, %c0_i32 : i32, i32
  }
}

</mosaic_0001>

<llo_original>
// kernel: tpu_custom_call.1
$region0: #{tpu_custom_call.1}
  #allocation0 [shape = 'u32[]', space=smem, size = 0x4, offset = 0x4, fixed_abs, tag = 'smem constant byte address 0x4 - core index']
  #allocation1 [shape = 'u32[72,128]{1,0:T(1,128)}', space=vmem, size = 0x9000, scoped, tag = 'internal scratch']
  %s0 = inlined_call_operand.hbm [shape: f32[8,128], index: 0, kind: input, shape index: {}]
  %s1 = inlined_call_operand.hbm [shape: f32[128,128], index: 1, kind: input, shape index: {}]
  %s2 = inlined_call_operand.hbm [shape: f32[8,128], index: 2, kind: input, shape index: {}]
  %s3 = inlined_call_operand.hbm [shape: f32[8,128], index: 3, kind: output, shape index: {}]
  %s4 = sld [smem:[#allocation0]]
  $region34: #{tpu_custom_call.1} parent=0
    _
  %s6 = ssub.s32 1, %s4
  %s7 = scalar_select 0, %s6, %s4
  $region1: #{tpu_custom_call.1} parent=0
    #allocation2 [shape = 'u8[4096]{0}', space=vmem, size = 0x1000, scoped, tag = 'input window, operand 0, single buffered']
    #allocation3 [shape = 's32[1]{0}', space=sflag, size = 0x4, scoped, tag = 'scoped memory for tpu_custom_call.1']
    #allocation4 [shape = 's32[1]{0}', space=sflag, size = 0x4, scoped, tag = 'scoped memory for tpu_custom_call.1']
    #allocation5 [shape = 'u8[65536]{0}', space=vmem, size = 0x10000, scoped, tag = 'input window, operand 1, single buffered']
    #allocation6 [shape = 's32[1]{0}', space=sflag, size = 0x4, scoped, tag = 'scoped memory for tpu_custom_call.1']
    #allocation7 [shape = 'u8[4096]{0}', space=vmem, size = 0x1000, scoped, tag = 'input window, operand 2, single buffered']
    #allocation8 [shape = 'u8[4096]{0}', space=vmem, size = 0x1000, scoped, tag = 'output window, operand 0, single buffered']
    %8 = vsyncpa [#allocation3], 0
    %9 = vsyncpa [#allocation6], 0
    %10 = vsyncpa [#allocation4], 0
    // Predicated region
    $region2: #{tpu_custom_call.1} parent=1 // pred_check
      _
    $region3: #{tpu_custom_call.1} parent=1 // pred_check_branch
      %12 = sbr.rel (0) target = $region5
    $region4: #{tpu_custom_call.1} parent=1 // pred_region
      %14 = vsyncadd [#allocation3], 0
      %s16 = sshll.u32 %s0, 4
      %s17 = int_to_ptr.hbm [resolvable:$true] %s16
      %s18 = sshll.u32 [#allocation2], 4
      %s19 = int_to_ptr.vmem [resolvable:$true] %s18
      %21 = dma.hbm_to_vmem [thread:$0]  %s17, 128, %s19, [#allocation3]
    $region5: #{tpu_custom_call.1} parent=1 // pred_fallthru
      _
    // Predicated region
    $region6: #{tpu_custom_call.1} parent=1 // pred_check
      _
    $region7: #{tpu_custom_call.1} parent=1 // pred_check_branch
      %23 = sbr.rel (0) target = $region9
    $region8: #{tpu_custom_call.1} parent=1 // pred_region
      %25 = vsyncadd [#allocation6], 0
      %s26 = sshll.u32 %s1, 4
      %s27 = int_to_ptr.hbm [resolvable:$true] %s26
      %s28 = sshll.u32 [#allocation5], 4
      %s29 = int_to_ptr.vmem [resolvable:$true] %s28
      %34 = dma.hbm_to_vmem [thread:$0]  %s27, 2048, %s29, [#allocation6], 128, 128, 8
    $region9: #{tpu_custom_call.1} parent=1 // pred_fallthru
      _
    // Predicated region
    $region10: #{tpu_custom_call.1} parent=1 // pred_check
      _
    $region11: #{tpu_custom_call.1} parent=1 // pred_check_branch
      %36 = sbr.rel (0) target = $region13
    $region12: #{tpu_custom_call.1} parent=1 // pred_region
      %38 = vsyncadd [#allocation6], 0
      %s40 = sshll.u32 %s2, 4
      %s41 = int_to_ptr.hbm [resolvable:$true] %s40
      %s42 = sshll.u32 [#allocation7], 4
      %s43 = int_to_ptr.vmem [resolvable:$true] %s42
      %45 = dma.hbm_to_vmem [thread:$0]  %s41, 128, %s43, [#allocation6]
    $region13: #{tpu_custom_call.1} parent=1 // pred_fallthru
      _
    // Predicated region
    $region14: #{tpu_custom_call.1} parent=1 // pred_check
      _
    $region15: #{tpu_custom_call.1} parent=1 // pred_check_branch
      %47 = sbr.rel (0) target = $region17
    $region16: #{tpu_custom_call.1} parent=1 // pred_region
      %49 = dma.done [#allocation3], 128
    $region17: #{tpu_custom_call.1} parent=1 // pred_fallthru
      _
    // Predicated region
    $region18: #{tpu_custom_call.1} parent=1 // pred_check
      _
    $region19: #{tpu_custom_call.1} parent=1 // pred_check_branch
      %51 = sbr.rel (0) target = $region21
    $region20: #{tpu_custom_call.1} parent=1 // pred_region
      %53 = dma.done [#allocation6], 2048
    $region21: #{tpu_custom_call.1} parent=1 // pred_fallthru
      _
    // Predicated region
    $region22: #{tpu_custom_call.1} parent=1 // pred_check
      _
    $region23: #{tpu_custom_call.1} parent=1 // pred_check_branch
      %55 = sbr.rel (0) target = $region25
    $region24: #{tpu_custom_call.1} parent=1 // pred_region
      %57 = dma.done [#allocation6], 128
    $region25: #{tpu_custom_call.1} parent=1 // pred_fallthru
      _
    %v58 = vld [vmem:[#allocation2] sm:$0xff]
    %v59 = vld [vmem:[#allocation5] sm:$0xff]
    %v60 = vld [vmem:[#allocation5 + $0x8] sm:$0xff]
    %v61 = vld [vmem:[#allocation5 + $0x10] sm:$0xff]
    %v62 = vld [vmem:[#allocation5 + $0x18] sm:$0xff]
    %v63 = vld [vmem:[#allocation5 + $0x20] sm:$0xff]
    %v64 = vld [vmem:[#allocation5 + $0x28] sm:$0xff]
    %v65 = vld [vmem:[#allocation5 + $0x30] sm:$0xff]
    %v66 = vld [vmem:[#allocation5 + $0x38] sm:$0xff]
    %v67 = vld [vmem:[#allocation5 + $0x40] sm:$0xff]
    %v68 = vld [vmem:[#allocation5 + $0x48] sm:$0xff]
    %v69 = vld [vmem:[#allocation5 + $0x50] sm:$0xff]
    %v70 = vld [vmem:[#allocation5 + $0x58] sm:$0xff]
    %v71 = vld [vmem:[#allocation5 + $0x60] sm:$0xff]
    %v72 = vld [vmem:[#allocation5 + $0x68] sm:$0xff]
    %v73 = vld [vmem:[#allocation5 + $0x70] sm:$0xff]
    %v74 = vld [vmem:[#allocation5 + $0x78] sm:$0xff]
    %v75 = vld [vmem:[#allocation7] sm:$0x1]
    %v76 = vperm.slane %v75, 0
    %77 = vmatpush.msra.mxu0 %v74
    %78 = vmatpush.msra.mxu0 %v73
    %79 = vmatpush.msra.mxu0 %v72
    %80 = vmatpush.msra.mxu0 %v71
    %81 = vmatpush.msra.mxu0 %v70
    %82 = vmatpush.msra.mxu0 %v69
    %83 = vmatpush.msra.mxu0 %v68
    %84 = vmatpush.msra.mxu0 %v67
    %85 = vmatpush.msra.mxu0 %v66
    %86 = vmatpush.msra.mxu0 %v65
    %87 = vmatpush.msra.mxu0 %v64
    %88 = vmatpush.msra.mxu0 %v63
    %89 = vmatpush.msra.mxu0 %v62
    %90 = vmatpush.msra.mxu0 %v61
    %91 = vmatpush.msra.mxu0 %v60
    %92 = vmatpush.msra.mxu0 %v59
    %93 = vmatmul.f32.gmra.mxu0 %v58
    %v94 = vpop.f32.mrf.mxu0
    %v95 = vadd.f32 %v76, %v94
    %96 = vdwg.mxu0
    %97 = vst [vmem:[#allocation8] sm:$0xff] %v95
    // Predicated region
    $region26: #{tpu_custom_call.1} parent=1 // pred_check
      _
    $region27: #{tpu_custom_call.1} parent=1 // pred_check_branch
      %99 = sbr.rel (0) target = $region29
    $region28: #{tpu_custom_call.1} parent=1 // pred_region
      %101 = vsyncadd [#allocation4], 0
      %s103 = sshll.u32 [#allocation8], 4
      %s104 = int_to_ptr.vmem [resolvable:$true] %s103
      %s105 = sshll.u32 %s3, 4
      %s106 = int_to_ptr.hbm [resolvable:$true] %s105
      %108 = dma.vmem_to_hbm [thread:$0]  %s104, 128, %s106, [#allocation4]
    $region29: #{tpu_custom_call.1} parent=1 // pred_fallthru
      _
    // Predicated region
    $region30: #{tpu_custom_call.1} parent=1 // pred_check
      _
    $region31: #{tpu_custom_call.1} parent=1 // pred_check_branch
      %110 = sbr.rel (0) target = $region33
    $region32: #{tpu_custom_call.1} parent=1 // pred_region
      %112 = dma.done [#allocation4], 128
    $region33: #{tpu_custom_call.1} parent=1 // pred_fallthru
      _
    %113 = vsyncpa [#allocation3], 1
    %114 = vsyncpa [#allocation6], 1
    %115 = vsyncpa [#allocation4], 1

</llo_original>
